<compile_context>
chip_gen: v7x
topology: tpu7x:2x2x1
jax: 0.10.0
libtpu: 0.0.40
codegen_flags: <defaults>
</compile_context>

<pallas_src>
import numpy as np
import jax
import jax.numpy as jnp
from jax.experimental import pallas as pl
from jax.experimental.pallas import tpu as pltpu


# ----------------------------- sizing helpers -------------------------------

def _round_up(x, m):
    return (x + m - 1) // m * m


def _sublane_multiple(dtype):
    # native sublane multiple of the second-to-last tile dim per dtype width
    return {4: 8, 2: 16, 1: 32}.get(jnp.dtype(dtype).itemsize, 8)


_VMEM_LIMIT_CACHE = [None]


def _vmem_limit_bytes():
    """Per-generation scoped-VMEM limit: ~half of physical VMEM (≈64 MiB on
    v5e/v6e's 128 MiB, ≈32 MiB on v7x's 64 MiB); conservative fallback if the
    hardware query is unavailable."""
    if _VMEM_LIMIT_CACHE[0] is None:
        cap = 64 * 1024 * 1024
        try:
            cap = int(getattr(pltpu.get_tpu_info(), "vmem_capacity_bytes", cap))
        except Exception:
            pass
        _VMEM_LIMIT_CACHE[0] = max(16 * 1024 * 1024,
                                   min(cap // 2, 96 * 1024 * 1024))
    return _VMEM_LIMIT_CACHE[0]


def _padded_row_bytes(trailing_shape, dtype):
    """VMEM bytes of ONE leading-axis row of a block after Mosaic pads the
    trailing two block dims up to native (sublane, 128) tiles."""
    itemsize = jnp.dtype(dtype).itemsize
    dims = [int(d) for d in trailing_shape]
    if not dims:
        return itemsize
    dims[-1] = _round_up(dims[-1], 128)
    if len(dims) >= 2:
        dims[-2] = _round_up(dims[-2], _sublane_multiple(dtype))
    n = 1
    for d in dims:
        n *= d
    return n * itemsize


def _choose_tile(n, per_row_bytes, budget, *, align=8, cap=2048):
    """Largest aligned leading-axis tile whose DOUBLE-BUFFERED blocks fit
    `budget`, additionally capped so the grid has >= 2 steps (required for the
    'parallel' axis to engage v7x's second TensorCore)."""
    n_aligned = _round_up(max(int(n), 1), align)
    t = max(align, (budget // (2 * max(int(per_row_bytes), 1))) // align * align)
    if n_aligned >= 2 * align:
        t = min(t, max(align, (n_aligned // 2) // align * align))
    return int(min(t, cap, n_aligned))


# --------------------- kernel 1: masked mean over seq -----------------------

def _avg_attr_kernel(e_ref, lens_ref, out_ref):
    # e: (TN, L*D) lane-dense ; lens: (TN, 1) int32 ; out: (TN, D) f32
    lens = lens_ref[...]                               # (TN, 1)
    d = out_ref.shape[-1]
    L = e_ref.shape[-1] // d
    # Masked fold over L: per-slice select (vsel) + add; exact f32 arithmetic.
    acc = jnp.where(0 < lens, e_ref[:, 0:d].astype(jnp.float32), 0.0)
    for l in range(1, L):
        x = e_ref[:, l * d:(l + 1) * d].astype(jnp.float32)
        acc = acc + jnp.where(l < lens, x, 0.0)
    # Guard cnt==0 -> 0 (PyTorch would produce 0/0 = NaN); intentional.
    cnt = jnp.maximum(lens, 1).astype(jnp.float32)
    out_ref[...] = acc * pl.reciprocal(cnt, approx=False)


def masked_avg_attr(table, ids, lens, *, tile_n=None, vmem_limit=None):
    """Masked mean over axis=1 of table[ids] (N, L, D); indices are padded
    BEFORE the gather and the gathered stream is kept 128-lane dense."""
    N, L = ids.shape
    D = table.shape[-1]
    if vmem_limit is None:
        vmem_limit = _vmem_limit_bytes()
    budget = vmem_limit // 2
    per_row = (_padded_row_bytes((L * D,), table.dtype)      # gathered stream
               + _padded_row_bytes((1,), jnp.int32)          # lens column
               + _padded_row_bytes((D,), jnp.float32))       # output
    if tile_n is None:
        tile_n = _choose_tile(N, per_row, budget)
    n_pad = _round_up(N, tile_n)
    if n_pad != N:                                            # pad int32 indices (cheap)
        ids = jnp.pad(ids, ((0, n_pad - N), (0, 0)))
        lens = jnp.pad(lens, (0, n_pad - N))
    e = table[ids].reshape(n_pad, L * D)                      # lane-dense gathered stream
    lens2d = lens.astype(jnp.int32).reshape(n_pad, 1)

    out = pl.pallas_call(
        _avg_attr_kernel,
        out_shape=jax.ShapeDtypeStruct((n_pad, D), jnp.float32),
        grid=(n_pad // tile_n,),
        in_specs=[
            pl.BlockSpec((tile_n, L * D), lambda i: (i, 0)),
            pl.BlockSpec((tile_n, 1), lambda i: (i, 0)),
        ],
        out_specs=pl.BlockSpec((tile_n, D), lambda i: (i, 0)),
        compiler_params=pltpu.CompilerParams(
            dimension_semantics=("parallel",),
            vmem_limit_bytes=vmem_limit),
    )(e, lens2d)
    return out[:N]


# ----------------- kernel 2: fused 4-table logits (lane-dense) --------------

def _logits_kernel(e_ref, q_ref, out_ref):
    # e: (TB, T, 4D) ; q: (TB, 4D) ; out: (TB, T) f32
    e = e_ref[...].astype(jnp.float32)
    q = q_ref[...].astype(jnp.float32)
    out_ref[...] = jnp.sum(e * q[:, None, :], axis=-1)


def fused_logits(table_cat, targets, query_cat, *, tile_b=None, vmem_limit=None):
    """logits[b, t] = <table_cat[targets[b, t], :], query_cat[b, :]> with a
    single lane-dense (B, T, 4D) gather (indices padded before the gather)."""
    B, T = targets.shape
    D4 = table_cat.shape[-1]
    if vmem_limit is None:
        vmem_limit = _vmem_limit_bytes()
    budget = vmem_limit // 2
    per_row = (_padded_row_bytes((T, D4), table_cat.dtype)    # gathered stream
               + _padded_row_bytes((D4,), query_cat.dtype)    # queries
               + _padded_row_bytes((T,), jnp.float32))        # output
    if tile_b is None:
        tile_b = _choose_tile(B, per_row, budget)
    b_pad = _round_up(B, tile_b)
    if b_pad != B:                                            # pad int indices / tiny queries
        targets = jnp.pad(targets, ((0, b_pad - B), (0, 0)))
        query_cat = jnp.pad(query_cat, ((0, b_pad - B), (0, 0)))
    e = table_cat[targets]                                    # (b_pad, T, 4D) lane-dense

    out = pl.pallas_call(
        _logits_kernel,
        out_shape=jax.ShapeDtypeStruct((b_pad, T), jnp.float32),
        grid=(b_pad // tile_b,),
        in_specs=[pl.BlockSpec((tile_b, T, D4), lambda i: (i, 0, 0)),
                  pl.BlockSpec((tile_b, D4), lambda i: (i, 0))],
        out_specs=pl.BlockSpec((tile_b, T), lambda i: (i, 0)),
        compiler_params=pltpu.CompilerParams(
            dimension_semantics=("parallel",),
            vmem_limit_bytes=vmem_limit),
    )(e, query_cat)
    return out[:B]


# -------------------------------- glue (JAX) --------------------------------

def generate_valid_mask(lens, max_len):
    # torch f_generate_mask returns True for *invalid* positions; forward()
    # always negates it, so build the "valid" mask directly with the STATIC
    # tensor width (no device->host sync on max(lens), keeps the fn jit-able).
    return jnp.arange(max_len, dtype=jnp.int32)[None, :] < lens[:, None]


def segment_sum_by_lens(rows, seg_lens):
    # f_get_avg_attr_user: rows are packed contiguously per segment; the torch
    # scatter-into-zeros + sum over dim 1 == segment sum by segment id.
    n_seg = seg_lens.shape[0]
    n_rows = rows.shape[0]
    boundaries = jnp.cumsum(seg_lens)
    seg_ids = jnp.searchsorted(boundaries, jnp.arange(n_rows), side="right")
    return jax.ops.segment_sum(rows, seg_ids, num_segments=n_seg)


def attr_network_forward(params,
                         ref_attr_item_user, ref_attr_len_item_user, ref_item_len_user,
                         ref_attr_user_item, ref_attr_len_user_item, ref_user_len_item,
                         user_ids, item_ids,
                         pos_targets, pos_lens, neg_targets, neg_lens):
    # ---- hierarchical attribute aggregation (both directions in ONE call) ----
    L = max(ref_attr_item_user.shape[1], ref_attr_user_item.shape[1])

    def pad_len(ids):
        return jnp.pad(ids, ((0, 0), (0, L - ids.shape[1])))

    n_iu = ref_attr_item_user.shape[0]
    ids_all = jnp.concatenate([pad_len(ref_attr_item_user),
                               pad_len(ref_attr_user_item)], axis=0)
    lens_all = jnp.concatenate([ref_attr_len_item_user, ref_attr_len_user_item], axis=0)
    avg_all = masked_avg_attr(params["attr_x"], ids_all, lens_all)      # (N_iu+N_ui, D)
    attr_x_item_user = avg_all[:n_iu]
    attr_x_user_item = avg_all[n_iu:]

    user_x = segment_sum_by_lens(attr_x_item_user, ref_item_len_user)   # (B, D)
    item_x = segment_sum_by_lens(attr_x_user_item, ref_user_len_item)   # (B, D)

    # ---- id embeddings ----
    user_embed = params["user_emb"][user_ids]                           # (B, D)
    item_embed = params["item_emb"][item_ids]                           # (B, D)

    # ---- fused pos/neg logits: ONE lane-dense (B, T, 4D) gather --------------
    # Weight-sized concat done once per call (not a per-batch HBM round trip).
    out_cat = jnp.concatenate([params["out_user"], params["out_item"],
                               params["out_user_x"], params["out_item_x"]], axis=-1)
    query_cat = jnp.concatenate([user_embed, item_embed, user_x, item_x], axis=-1)
    targets = jnp.concatenate([pos_targets, neg_targets], axis=1)       # (B, Tp+Tn)
    logits = fused_logits(out_cat, targets, query_cat)

    # ---- masks / targets (static widths) ----
    pos_mask = generate_valid_mask(pos_lens, pos_targets.shape[1])      # (B, Tp) bool
    neg_mask = generate_valid_mask(neg_lens, neg_targets.shape[1])      # (B, Tn) bool
    mask = jnp.concatenate([pos_mask, neg_mask], axis=-1)               # (B, Tp+Tn)
    new_targets = jnp.concatenate(
        [jnp.ones_like(pos_targets), jnp.zeros_like(neg_targets)], axis=1)
    new_targets = new_targets * mask
    return logits, mask, new_targets


# ---------------------------------- main -------------------------------------

if __name__ == "__main__":
    # small, deterministic config
    VOCAB, USERS, ITEMS, D = 32, 10, 12, 32   # attr_emb = user_emb = item_emb = D
    B = 2
    L_ATTR = 8
    T_POS, T_NEG = 4, 6

    key = jax.random.PRNGKey(0)
    ks = jax.random.split(key, 10)
    initrange = 0.1
    params = {
        "attr_x":     jax.random.normal(ks[0], (VOCAB, D), jnp.float32),
        "out_user":   jax.random.uniform(ks[1], (VOCAB, D), jnp.float32, -initrange, initrange),
        "out_item":   jax.random.uniform(ks[2], (VOCAB, D), jnp.float32, -initrange, initrange),
        "out_user_x": jax.random.uniform(ks[3], (VOCAB, D), jnp.float32, -initrange, initrange),
        "out_item_x": jax.random.uniform(ks[4], (VOCAB, D), jnp.float32, -initrange, initrange),
        "user_emb":   jax.random.uniform(ks[5], (USERS, D), jnp.float32, -initrange, initrange),
        "item_emb":   jax.random.uniform(ks[6], (ITEMS, D), jnp.float32, -initrange, initrange),
    }

    # hierarchical reference structure
    ref_item_len_user = jnp.array([3, 2], jnp.int32)    # items per user -> 5 rows total
    ref_user_len_item = jnp.array([2, 3], jnp.int32)    # users per item -> 5 rows total
    N_IU = int(ref_item_len_user.sum())
    N_UI = int(ref_user_len_item.sum())

    ref_attr_item_user = jax.random.randint(ks[7], (N_IU, L_ATTR), 0, VOCAB, jnp.int32)
    ref_attr_len_item_user = jnp.array([8, 3, 5, 2, 8], jnp.int32)   # max == L_ATTR
    ref_attr_user_item = jax.random.randint(ks[8], (N_UI, L_ATTR), 0, VOCAB, jnp.int32)
    ref_attr_len_user_item = jnp.array([4, 8, 2, 6, 8], jnp.int32)   # max == L_ATTR

    user_ids = jnp.array([1, 7], jnp.int32)
    item_ids = jnp.array([0, 5], jnp.int32)
    pos_targets = jax.random.randint(ks[9], (B, T_POS), 0, VOCAB, jnp.int32)
    pos_lens = jnp.array([4, 2], jnp.int32)              # max == T_POS
    neg_targets = jax.random.randint(jax.random.PRNGKey(123), (B, T_NEG), 0, VOCAB, jnp.int32)
    neg_lens = jnp.array([6, 3], jnp.int32)              # max == T_NEG

    fwd = jax.jit(attr_network_forward)
    logits, mask, new_targets = fwd(
        params,
        ref_attr_item_user, ref_attr_len_item_user, ref_item_len_user,
        ref_attr_user_item, ref_attr_len_user_item, ref_user_len_item,
        user_ids, item_ids, pos_targets, pos_lens, neg_targets, neg_lens)
    jax.block_until_ready((logits, mask, new_targets))

    # ---- pure-JAX reference check of the Pallas hot paths ----
    def ref_avg(table, ids, lens):
        e = table[ids]
        m = (jnp.arange(ids.shape[1])[None, :] < lens[:, None]).astype(jnp.float32)
        return (e * m[:, :, None]).sum(1) / m.sum(1, keepdims=True)

    a_iu = ref_avg(params["attr_x"], ref_attr_item_user, ref_attr_len_item_user)
    ux = segment_sum_by_lens(a_iu, ref_item_len_user)
    a_ui = ref_avg(params["attr_x"], ref_attr_user_item, ref_attr_len_user_item)
    ix = segment_sum_by_lens(a_ui, ref_user_len_item)
    tgt = jnp.concatenate([pos_targets, neg_targets], axis=1)
    ref_logits = (
        jnp.einsum("btd,bd->bt", params["out_user"][tgt], params["user_emb"][user_ids]) +
        jnp.einsum("btd,bd->bt", params["out_item"][tgt], params["item_emb"][item_ids]) +
        jnp.einsum("btd,bd->bt", params["out_user_x"][tgt], ux) +
        jnp.einsum("btd,bd->bt", params["out_item_x"][tgt], ix))
    np.testing.assert_allclose(np.asarray(logits), np.asarray(ref_logits),
                               rtol=1e-5, atol=1e-5)
    ref_mask = jnp.concatenate([jnp.arange(T_POS)[None, :] < pos_lens[:, None],
                                jnp.arange(T_NEG)[None, :] < neg_lens[:, None]], axis=-1)
    np.testing.assert_array_equal(np.asarray(mask), np.asarray(ref_mask))
    assert mask.shape == (B, T_POS + T_NEG) and new_targets.shape == (B, T_POS + T_NEG)

    print("KERNEL_OK")
</pallas_src>

<mosaic_0001>
module attributes {stable_mosaic.version = 11 : i64} {
  func.func @_avg_attr_kernel(%arg0: i32, %arg1: memref<8x256xf32, #tpu.memory_space<vmem>>, %arg2: memref<8x1xi32, #tpu.memory_space<vmem>>, %arg3: memref<8x32xf32, #tpu.memory_space<vmem>>) attributes {dimension_semantics = [#tpu.dimension_semantics<parallel>], iteration_bounds = array<i64: 2>, scalar_prefetch = 0 : i64, scratch_operands = 0 : i64, tpu.core_type = #tpu.core_type<tc>, window_params = [{transform_indices = @transform_0, window_bounds = array<i64: 8, 256>}, {transform_indices = @transform_1, window_bounds = array<i64: 8, 1>}, {transform_indices = @transform_2, window_bounds = array<i64: 8, 32>}]} {
    %c0 = arith.constant 0 : index
    %c0_0 = arith.constant 0 : index
    %0 = vector.load %arg2[%c0, %c0_0] : memref<8x1xi32, #tpu.memory_space<vmem>>, vector<8x1xi32>
    %c0_i32 = arith.constant 0 : i32
    %1 = vector.broadcast %c0_i32 : i32 to vector<8x1xi32>
    %2 = arith.cmpi sgt, %0, %1 : vector<8x1xi32>
    %c0_1 = arith.constant 0 : index
    %c0_2 = arith.constant 0 : index
    %3 = vector.load %arg1[%c0_1, %c0_2] : memref<8x256xf32, #tpu.memory_space<vmem>>, vector<8x32xf32>
    %cst = arith.constant 0.000000e+00 : f32
    %4 = vector.shape_cast %2 : vector<8x1xi1> to vector<8x1xi1>
    %5 = vector.broadcast %4 : vector<8x1xi1> to vector<8x32xi1>
    %6 = vector.broadcast %cst : f32 to vector<8x32xf32>
    %7 = arith.select %5, %3, %6 : vector<8x32xi1>, vector<8x32xf32>
    %c0_3 = arith.constant 0 : index
    %c32 = arith.constant 32 : index
    %8 = vector.load %arg1[%c0_3, %c32] : memref<8x256xf32, #tpu.memory_space<vmem>>, vector<8x32xf32>
    %c1_i32 = arith.constant 1 : i32
    %9 = vector.broadcast %c1_i32 : i32 to vector<8x1xi32>
    %10 = arith.cmpi sgt, %0, %9 : vector<8x1xi32>
    %cst_4 = arith.constant 0.000000e+00 : f32
    %11 = vector.shape_cast %10 : vector<8x1xi1> to vector<8x1xi1>
    %12 = vector.broadcast %11 : vector<8x1xi1> to vector<8x32xi1>
    %13 = vector.broadcast %cst_4 : f32 to vector<8x32xf32>
    %14 = arith.select %12, %8, %13 : vector<8x32xi1>, vector<8x32xf32>
    %15 = arith.addf %7, %14 : vector<8x32xf32>
    %c0_5 = arith.constant 0 : index
    %c64 = arith.constant 64 : index
    %16 = vector.load %arg1[%c0_5, %c64] : memref<8x256xf32, #tpu.memory_space<vmem>>, vector<8x32xf32>
    %c2_i32 = arith.constant 2 : i32
    %17 = vector.broadcast %c2_i32 : i32 to vector<8x1xi32>
    %18 = arith.cmpi sgt, %0, %17 : vector<8x1xi32>
    %cst_6 = arith.constant 0.000000e+00 : f32
    %19 = vector.shape_cast %18 : vector<8x1xi1> to vector<8x1xi1>
    %20 = vector.broadcast %19 : vector<8x1xi1> to vector<8x32xi1>
    %21 = vector.broadcast %cst_6 : f32 to vector<8x32xf32>
    %22 = arith.select %20, %16, %21 : vector<8x32xi1>, vector<8x32xf32>
    %23 = arith.addf %15, %22 : vector<8x32xf32>
    %c0_7 = arith.constant 0 : index
    %c96 = arith.constant 96 : index
    %24 = vector.load %arg1[%c0_7, %c96] : memref<8x256xf32, #tpu.memory_space<vmem>>, vector<8x32xf32>
    %c3_i32 = arith.constant 3 : i32
    %25 = vector.broadcast %c3_i32 : i32 to vector<8x1xi32>
    %26 = arith.cmpi sgt, %0, %25 : vector<8x1xi32>
    %cst_8 = arith.constant 0.000000e+00 : f32
    %27 = vector.shape_cast %26 : vector<8x1xi1> to vector<8x1xi1>
    %28 = vector.broadcast %27 : vector<8x1xi1> to vector<8x32xi1>
    %29 = vector.broadcast %cst_8 : f32 to vector<8x32xf32>
    %30 = arith.select %28, %24, %29 : vector<8x32xi1>, vector<8x32xf32>
    %31 = arith.addf %23, %30 : vector<8x32xf32>
    %c0_9 = arith.constant 0 : index
    %c128 = arith.constant 128 : index
    %32 = vector.load %arg1[%c0_9, %c128] : memref<8x256xf32, #tpu.memory_space<vmem>>, vector<8x32xf32>
    %c4_i32 = arith.constant 4 : i32
    %33 = vector.broadcast %c4_i32 : i32 to vector<8x1xi32>
    %34 = arith.cmpi sgt, %0, %33 : vector<8x1xi32>
    %cst_10 = arith.constant 0.000000e+00 : f32
    %35 = vector.shape_cast %34 : vector<8x1xi1> to vector<8x1xi1>
    %36 = vector.broadcast %35 : vector<8x1xi1> to vector<8x32xi1>
    %37 = vector.broadcast %cst_10 : f32 to vector<8x32xf32>
    %38 = arith.select %36, %32, %37 : vector<8x32xi1>, vector<8x32xf32>
    %39 = arith.addf %31, %38 : vector<8x32xf32>
    %c0_11 = arith.constant 0 : index
    %c160 = arith.constant 160 : index
    %40 = vector.load %arg1[%c0_11, %c160] : memref<8x256xf32, #tpu.memory_space<vmem>>, vector<8x32xf32>
    %c5_i32 = arith.constant 5 : i32
    %41 = vector.broadcast %c5_i32 : i32 to vector<8x1xi32>
    %42 = arith.cmpi sgt, %0, %41 : vector<8x1xi32>
    %cst_12 = arith.constant 0.000000e+00 : f32
    %43 = vector.shape_cast %42 : vector<8x1xi1> to vector<8x1xi1>
    %44 = vector.broadcast %43 : vector<8x1xi1> to vector<8x32xi1>
    %45 = vector.broadcast %cst_12 : f32 to vector<8x32xf32>
    %46 = arith.select %44, %40, %45 : vector<8x32xi1>, vector<8x32xf32>
    %47 = arith.addf %39, %46 : vector<8x32xf32>
    %c0_13 = arith.constant 0 : index
    %c192 = arith.constant 192 : index
    %48 = vector.load %arg1[%c0_13, %c192] : memref<8x256xf32, #tpu.memory_space<vmem>>, vector<8x32xf32>
    %c6_i32 = arith.constant 6 : i32
    %49 = vector.broadcast %c6_i32 : i32 to vector<8x1xi32>
    %50 = arith.cmpi sgt, %0, %49 : vector<8x1xi32>
    %cst_14 = arith.constant 0.000000e+00 : f32
    %51 = vector.shape_cast %50 : vector<8x1xi1> to vector<8x1xi1>
    %52 = vector.broadcast %51 : vector<8x1xi1> to vector<8x32xi1>
    %53 = vector.broadcast %cst_14 : f32 to vector<8x32xf32>
    %54 = arith.select %52, %48, %53 : vector<8x32xi1>, vector<8x32xf32>
    %55 = arith.addf %47, %54 : vector<8x32xf32>
    %c0_15 = arith.constant 0 : index
    %c224 = arith.constant 224 : index
    %56 = vector.load %arg1[%c0_15, %c224] : memref<8x256xf32, #tpu.memory_space<vmem>>, vector<8x32xf32>
    %c7_i32 = arith.constant 7 : i32
    %57 = vector.broadcast %c7_i32 : i32 to vector<8x1xi32>
    %58 = arith.cmpi sgt, %0, %57 : vector<8x1xi32>
    %cst_16 = arith.constant 0.000000e+00 : f32
    %59 = vector.shape_cast %58 : vector<8x1xi1> to vector<8x1xi1>
    %60 = vector.broadcast %59 : vector<8x1xi1> to vector<8x32xi1>
    %61 = vector.broadcast %cst_16 : f32 to vector<8x32xf32>
    %62 = arith.select %60, %56, %61 : vector<8x32xi1>, vector<8x32xf32>
    %63 = arith.addf %55, %62 : vector<8x32xf32>
    %c1_i32_17 = arith.constant 1 : i32
    %64 = vector.broadcast %c1_i32_17 : i32 to vector<8x1xi32>
    %65 = arith.maxsi %0, %64 : vector<8x1xi32>
    %66 = arith.sitofp %65 : vector<8x1xi32> to vector<8x1xf32>
    %67 = tpu.reciprocal %66 : vector<8x1xf32> -> vector<8x1xf32>
    %68 = vector.broadcast %67 : vector<8x1xf32> to vector<8x32xf32>
    %69 = arith.mulf %63, %68 : vector<8x32xf32>
    %c0_18 = arith.constant 0 : index
    %c0_19 = arith.constant 0 : index
    %70 = vector.load %arg3[%c0_18, %c0_19] : memref<8x32xf32, #tpu.memory_space<vmem>>, vector<8x32xf32>
    tpu.vector_store %arg3[%c0_18, %c0_19], %69 {strides = array<i32>} : memref<8x32xf32, #tpu.memory_space<vmem>>, vector<8x32xf32>,
    return
  }
  func.func @transform_0(%arg0: i32) -> (i32, i32) {
    %c0_i32 = arith.constant 0 : i32
    %c0_i32_0 = arith.constant 0 : i32
    return %arg0, %c0_i32 : i32, i32
  }
  func.func @transform_1(%arg0: i32) -> (i32, i32) {
    %c0_i32 = arith.constant 0 : i32
    %c0_i32_0 = arith.constant 0 : i32
    return %arg0, %c0_i32 : i32, i32
  }
  func.func @transform_2(%arg0: i32) -> (i32, i32) {
    %c0_i32 = arith.constant 0 : i32
    %c0_i32_0 = arith.constant 0 : i32
    return %arg0, %c0_i32 : i32, i32
  }
}

module attributes {stable_mosaic.version = 11 : i64} {
  func.func @_logits_kernel(%arg0: i32, %arg1: memref<8x10x128xf32, #tpu.memory_space<vmem>>, %arg2: memref<8x128xf32, #tpu.memory_space<vmem>>, %arg3: memref<8x10xf32, #tpu.memory_space<vmem>>) attributes {dimension_semantics = [#tpu.dimension_semantics<parallel>], iteration_bounds = array<i64: 1>, scalar_prefetch = 0 : i64, scratch_operands = 0 : i64, tpu.core_type = #tpu.core_type<tc>, window_params = [{transform_indices = @transform_0, window_bounds = array<i64: 8, 10, 128>}, {transform_indices = @transform_1, window_bounds = array<i64: 8, 128>}, {transform_indices = @transform_2, window_bounds = array<i64: 8, 10>}]} {
    %c0 = arith.constant 0 : index
    %c0_0 = arith.constant 0 : index
    %c0_1 = arith.constant 0 : index
    %0 = vector.load %arg1[%c0, %c0_0, %c0_1] : memref<8x10x128xf32, #tpu.memory_space<vmem>>, vector<8x10x128xf32>
    %c0_2 = arith.constant 0 : index
    %c0_3 = arith.constant 0 : index
    %1 = vector.load %arg2[%c0_2, %c0_3] : memref<8x128xf32, #tpu.memory_space<vmem>>, vector<8x128xf32>
    %2 = vector.shape_cast %1 : vector<8x128xf32> to vector<8x1x128xf32>
    %3 = vector.broadcast %2 : vector<8x1x128xf32> to vector<8x10x128xf32>
    %4 = arith.mulf %0, %3 : vector<8x10x128xf32>
    %cst = arith.constant dense<0.000000e+00> : vector<8x10xf32>
    %5 = vector.multi_reduction <add>, %4, %cst [2] : vector<8x10x128xf32> to vector<8x10xf32>
    %c0_4 = arith.constant 0 : index
    %c0_5 = arith.constant 0 : index
    %6 = vector.load %arg3[%c0_4, %c0_5] : memref<8x10xf32, #tpu.memory_space<vmem>>, vector<8x10xf32>
    tpu.vector_store %arg3[%c0_4, %c0_5], %5 {strides = array<i32>} : memref<8x10xf32, #tpu.memory_space<vmem>>, vector<8x10xf32>,
    return
  }
  func.func @transform_0(%arg0: i32) -> (i32, i32, i32) {
    %c0_i32 = arith.constant 0 : i32
    %c0_i32_0 = arith.constant 0 : i32
    %c0_i32_1 = arith.constant 0 : i32
    return %arg0, %c0_i32, %c0_i32_0 : i32, i32, i32
  }
  func.func @transform_1(%arg0: i32) -> (i32, i32) {
    %c0_i32 = arith.constant 0 : i32
    %c0_i32_0 = arith.constant 0 : i32
    return %arg0, %c0_i32 : i32, i32
  }
  func.func @transform_2(%arg0: i32) -> (i32, i32) {
    %c0_i32 = arith.constant 0 : i32
    %c0_i32_0 = arith.constant 0 : i32
    return %arg0, %c0_i32 : i32, i32
  }
}

</mosaic_0001>

<llo_original>
// kernel: custom-call
$region0: #{custom-call}
  %s0 = inlined_call_operand.vmem [shape: u32[5], index: 0, kind: output, shape index: {}]

// kernel: attr_network_forward.2
$region0: #{attr_network_forward.2}
  #allocation0 [shape = 'u32[]', space=smem, size = 0x4, offset = 0x4, fixed_abs, tag = 'smem constant byte address 0x4 - core index']
  #allocation1 [shape = 'u32[144,128]{1,0:T(1,128)}', space=vmem, size = 0x12000, scoped, tag = 'internal scratch']
  %s0 = inlined_call_operand.vmem [shape: f32[16,256], index: 0, kind: input, shape index: {}]
  %s1 = inlined_call_operand.vmem [shape: s32[16,1], index: 1, kind: input, shape index: {}]
  %s2 = inlined_call_operand.vmem [shape: f32[16,32], index: 2, kind: output, shape index: {}]
  %s3 = sld [smem:[#allocation0]]
  $region41: #{attr_network_forward.2} parent=0
    _
  %s5 = ssub.s32 1, %s3
  %s6 = scalar_select 0, %s5, %s3
  loop: start=0, step=1, limit=4
  $region2: #{attr_network_forward.2} parent=0 // loop_pre_header
    _
  $region3: #{attr_network_forward.2} parent=0 // loop_header
    %s8 = sphi 0, %s12
    %p9 = scmp.ge.s32.totalorder %s8, 4
    %s18 = sphi 0, %s20
    %s21 = sphi 0, %s18
    %s22 = sphi 0, %s21
    %s38 = sphi 0, %s22
    %s44 = sphi 0, %s46
    %s47 = sphi 0, %s44
    %s48 = sphi 0, %s47
    %s64 = sphi 0, %s48
    %s70 = sphi 0, %s72
    %s73 = sphi 0, %s70
    %s74 = sphi 0, %s73
    %s90 = sphi 0, %s74
  $region4: #{attr_network_forward.2} parent=0 // loop_header_branch
    %11 = sbr.rel (%p9) target = $region8
  $region5: #{attr_network_forward.2} parent=0 // loop_body
    %s13 = ssub.s32 %s8, 1
    %s14 = ssub.s32 %s8, 2
    %s15 = sadd.s32 %s8, 1
    %s16 = ssub.s32 %s8, %s15
    %p17 = scmp.eq.s32.totalorder %s16, 0
    %s19 = sadd.s32 %s18, 1
    %s20 = scalar_select %p17, %s18, %s19
    %p23 = pneg %p17
    %p24 = scmp.eq.s32.totalorder %s8, 1
    %p25 = por %p23, %p24
    %p26 = scmp.ne.s32.totalorder %s18, %s21
    %p27 = scmp.eq.s32.totalorder %s8, 0
    %p28 = por %p26, %p27
    %p29 = scmp.ne.s32.totalorder %s18, %s21
    %p30 = scmp.eq.s32.totalorder %s13, 1
    %p31 = por %p29, %p30
    %p32 = scmp.ne.s32.totalorder %s21, %s22
    %p33 = scmp.eq.s32.totalorder %s13, 0
    %p34 = por %p32, %p33
    %p35 = scmp.ne.s32.totalorder %s21, %s22
    %p36 = scmp.eq.s32.totalorder %s14, 1
    %p37 = por %p35, %p36
    %p39 = scmp.ne.s32.totalorder %s22, %s38
    %p40 = scmp.eq.s32.totalorder %s14, 0
    %p41 = por %p39, %p40
    %s42 = ssub.s32 %s8, %s15
    %p43 = scmp.eq.s32.totalorder %s42, 0
    %s45 = sadd.s32 %s44, 1
    %s46 = scalar_select %p43, %s44, %s45
    %p49 = pneg %p43
    %p50 = scmp.eq.s32.totalorder %s8, 1
    %p51 = por %p49, %p50
    %p52 = scmp.ne.s32.totalorder %s44, %s47
    %p53 = scmp.eq.s32.totalorder %s8, 0
    %p54 = por %p52, %p53
    %p55 = scmp.ne.s32.totalorder %s44, %s47
    %p56 = scmp.eq.s32.totalorder %s13, 1
    %p57 = por %p55, %p56
    %p58 = scmp.ne.s32.totalorder %s47, %s48
    %p59 = scmp.eq.s32.totalorder %s13, 0
    %p60 = por %p58, %p59
    %p61 = scmp.ne.s32.totalorder %s47, %s48
    %p62 = scmp.eq.s32.totalorder %s14, 1
    %p63 = por %p61, %p62
    %p65 = scmp.ne.s32.totalorder %s48, %s64
    %p66 = scmp.eq.s32.totalorder %s14, 0
    %p67 = por %p65, %p66
    %s68 = ssub.s32 %s8, %s15
    %p69 = scmp.eq.s32.totalorder %s68, 0
    %s71 = sadd.s32 %s70, 1
    %s72 = scalar_select %p69, %s70, %s71
    %p75 = pneg %p69
    %p76 = scmp.eq.s32.totalorder %s8, 1
    %p77 = por %p75, %p76
    %p78 = scmp.ne.s32.totalorder %s70, %s73
    %p79 = scmp.eq.s32.totalorder %s8, 0
    %p80 = por %p78, %p79
    %p81 = scmp.ne.s32.totalorder %s70, %s73
    %p82 = scmp.eq.s32.totalorder %s13, 1
    %p83 = por %p81, %p82
    %p84 = scmp.ne.s32.totalorder %s73, %s74
    %p85 = scmp.eq.s32.totalorder %s13, 0
    %p86 = por %p84, %p85
    %p87 = scmp.ne.s32.totalorder %s73, %s74
    %p88 = scmp.eq.s32.totalorder %s14, 1
    %p89 = por %p87, %p88
    %p91 = scmp.ne.s32.totalorder %s74, %s90
    %p92 = scmp.eq.s32.totalorder %s14, 0
    %p93 = por %p91, %p92
    %p94 = scmp.le.s32.totalorder 1, %s8
    %p95 = scmp.lt.s32.totalorder %s8, 3
    %p96 = pnand %p94, %p95
    %p97 = pneg %p96
    // Predicated region
    $region9: #{attr_network_forward.2} parent=5 // pred_check
      _
    $region10: #{attr_network_forward.2} parent=5 // pred_check_branch
      %99 = sbr.rel (%p96) target = $region12
    $region11: #{attr_network_forward.2} parent=5 // pred_region
      %s100 = ssub.s32 %s8, 1
    $region12: #{attr_network_forward.2} parent=5 // pred_fallthru
      _
    %p101 = scmp.lt.s32.totalorder %s8, 2
    // Predicated region
    $region13: #{attr_network_forward.2} parent=5 // pred_check
      %p102 = pneg %p101
    $region14: #{attr_network_forward.2} parent=5 // pred_check_branch
      %104 = sbr.rel (%p102) target = $region16
    $region15: #{attr_network_forward.2} parent=5 // pred_region
      // Predicated region
      $region17: #{attr_network_forward.2} parent=15 // pred_check
        %p105 = pneg %p28
      $region18: #{attr_network_forward.2} parent=15 // pred_check_branch
        %107 = sbr.rel (%p105) target = $region20
      $region19: #{attr_network_forward.2} parent=15 // pred_region
        %p108 = scmp.lt.s32.totalorder %s8, 1
        %s109 = scalar_select %p108, %s8, 1
        %s110 = smul.addr %s109, 2
        %s111 = smul.addr %s110, 8
        %s112 = scalar_lea.vmem %s0, %s111
      $region20: #{attr_network_forward.2} parent=15 // pred_fallthru
        _
      // Predicated region
      $region21: #{attr_network_forward.2} parent=15 // pred_check
        %p113 = pneg %p54
      $region22: #{attr_network_forward.2} parent=15 // pred_check_branch
        %115 = sbr.rel (%p113) target = $region24
      $region23: #{attr_network_forward.2} parent=15 // pred_region
        %p116 = scmp.lt.s32.totalorder %s8, 1
        %s117 = scalar_select %p116, %s8, 1
        %s118 = smul.addr %s117, 8
        %s119 = scalar_lea.vmem %s1, %s118
      $region24: #{attr_network_forward.2} parent=15 // pred_fallthru
        _
    $region16: #{attr_network_forward.2} parent=5 // pred_fallthru
      _
    %p120 = scmp.le.s32.totalorder 1, %s8
    %p121 = scmp.lt.s32.totalorder %s8, 3
    %p122 = pnand %p120, %p121
    %p123 = pneg %p122
    // Predicated region
    $region25: #{attr_network_forward.2} parent=5 // pred_check
      _
    $region26: #{attr_network_forward.2} parent=5 // pred_check_branch
      %125 = sbr.rel (%p122) target = $region28
    $region27: #{attr_network_forward.2} parent=5 // pred_region
      %s126 = ssub.s32 %s8, 1
      %p127 = scmp.lt.s32.totalorder %s13, 1
      %s128 = scalar_select %p127, %s13, 1
      %s129 = smul.addr %s128, 2
      %s130 = smul.addr %s129, 8
      %s131 = scalar_lea.vmem %s0, %s130
      %p132 = pneg %p34
      %p133 = pneg %p31
      %p134 = scmp.lt.s32.totalorder %s13, 1
      %s135 = scalar_select %p134, %s13, 1
      %s136 = smul.addr %s135, 8
      %s137 = scalar_lea.vmem %s1, %s136
      %p138 = pneg %p60
      %p139 = pneg %p57
      %p140 = pneg %p86
      %p141 = pneg %p83
      %p142 = scmp.lt.s32.totalorder %s13, 1
      %s143 = scalar_select %p142, %s13, 1
      %s144 = smul.addr %s143, 8
      %s145 = scalar_lea.vmem %s2, %s144
      %p146 = scmp.lt.s32.totalorder %s13, 1
      %s147 = scalar_select %p146, %s13, 1
      %s148 = smul.addr %s147, 2
      %s149 = smul.addr %s148, 8
      %s150 = scalar_lea.vmem %s0, %s149
      %p151 = scmp.lt.s32.totalorder %s13, 1
      %s152 = scalar_select %p151, %s13, 1
      %s153 = smul.addr %s152, 8
      %s154 = scalar_lea.vmem %s1, %s153
      %p155 = scmp.lt.s32.totalorder %s13, 1
      %s156 = scalar_select %p155, %s13, 1
      %s157 = smul.addr %s156, 8
      %s158 = scalar_lea.vmem %s2, %s157
      %v159 = vld [vmem:[%s154] sm:$0xff]
      %vm160 = vcmp.gt.s32.totalorder %v159, 0
      %v161 = vld [vmem:[%s150] sm:$0xff]
      %v162 = vsel %vm160, 1, 0
      %163 = vset.pattern.permute.xlu0 0
      %164 = vperm.xlu0 %163, %v162
      %v165 = vpop.permute.xlu0 %164
      %vm166 = vcmp.eq.s32.totalorder %v165, 1
      %v167 = vsel %vm166, %v161, 0.0
      %vm168 = vcmp.gt.s32.totalorder %v159, 1
      %v169 = vsel %vm168, 1, 0
      %170 = vset.pattern.permute.xlu0 0
      %171 = vperm.xlu0 %170, %v169
      %v172 = vpop.permute.xlu0 %171
      %vm173 = vcmp.eq.s32.totalorder %v172, 1
      %v174 = vsel %vm173, %v161, 0.0
      %176 = vrot.lane.b32.xlu0 %v174, 96
      %v177 = vpop.permute.xlu0 %176
      %v179 = vadd.f32 %v167, %v177
      %vm180 = vcmp.gt.s32.totalorder %v159, 2
      %v181 = vsel %vm180, 1, 0
      %182 = vset.pattern.permute.xlu0 0
      %183 = vperm.xlu0 %182, %v181
      %v184 = vpop.permute.xlu0 %183
      %vm185 = vcmp.eq.s32.totalorder %v184, 1
      %v186 = vsel %vm185, %v161, 0.0
      %188 = vrot.lane.b32.xlu0 %v186, 64
      %v189 = vpop.permute.xlu0 %188
      %v191 = vadd.f32 %v179, %v189
      %vm192 = vcmp.gt.s32.totalorder %v159, 3
      %v193 = vsel %vm192, 1, 0
      %194 = vset.pattern.permute.xlu0 0
      %195 = vperm.xlu0 %194, %v193
      %v196 = vpop.permute.xlu0 %195
      %vm197 = vcmp.eq.s32.totalorder %v196, 1
      %v198 = vsel %vm197, %v161, 0.0
      %200 = vrot.lane.b32.xlu0 %v198, 32
      %v201 = vpop.permute.xlu0 %200
      %v203 = vadd.f32 %v191, %v201
      %v204 = vld [vmem:[%s150 + $0x8] sm:$0xff]
      %vm205 = vcmp.gt.s32.totalorder %v159, 4
      %v206 = vsel %vm205, 1, 0
      %207 = vset.pattern.permute.xlu0 0
      %208 = vperm.xlu0 %207, %v206
      %v209 = vpop.permute.xlu0 %208
      %vm210 = vcmp.eq.s32.totalorder %v209, 1
      %v211 = vsel %vm210, %v204, 0.0
      %v212 = vadd.f32 %v203, %v211
      %vm213 = vcmp.gt.s32.totalorder %v159, 5
      %v214 = vsel %vm213, 1, 0
      %215 = vset.pattern.permute.xlu0 0
      %216 = vperm.xlu0 %215, %v214
      %v217 = vpop.permute.xlu0 %216
      %vm218 = vcmp.eq.s32.totalorder %v217, 1
      %v219 = vsel %vm218, %v204, 0.0
      %221 = vrot.lane.b32.xlu0 %v219, 96
      %v222 = vpop.permute.xlu0 %221
      %v224 = vadd.f32 %v212, %v222
      %vm225 = vcmp.gt.s32.totalorder %v159, 6
      %v226 = vsel %vm225, 1, 0
      %227 = vset.pattern.permute.xlu0 0
      %228 = vperm.xlu0 %227, %v226
      %v229 = vpop.permute.xlu0 %228
      %vm230 = vcmp.eq.s32.totalorder %v229, 1
      %v231 = vsel %vm230, %v204, 0.0
      %233 = vrot.lane.b32.xlu0 %v231, 64
      %v234 = vpop.permute.xlu0 %233
      %v236 = vadd.f32 %v224, %v234
      %vm237 = vcmp.gt.s32.totalorder %v159, 7
      %v238 = vsel %vm237, 1, 0
      %239 = vset.pattern.permute.xlu0 0
      %240 = vperm.xlu0 %239, %v238
      %v241 = vpop.permute.xlu0 %240
      %vm242 = vcmp.eq.s32.totalorder %v241, 1
      %v243 = vsel %vm242, %v204, 0.0
      %245 = vrot.lane.b32.xlu0 %v243, 32
      %v246 = vpop.permute.xlu0 %245
      %v248 = vadd.f32 %v236, %v246
      %vm249 = vcmp.gt.s32.totalorder %v159, 1
      %v250 = vsel %vm249, %v159, 1
      %v251 = vcvt.s32.f32 %v250
      %v252 = vrcp.pop %v251
      %254 = vset.pattern.permute.xlu0 0
      %255 = vperm.xlu0 %254, %v252
      %v256 = vpop.permute.xlu0 %255
      %v258 = vmul.f32 %v248, %v256
      %vm259 = vcmask 261120
      %260 = vst.msk [vmem:[%s158] sm:$0xff] %vm259, %v258
      %p261 = scmp.lt.s32.totalorder %s13, 1
      %s262 = scalar_select %p261, %s13, 1
      %s263 = smul.addr %s262, 8
      %s264 = scalar_lea.vmem %s2, %s263
      // Predicated region
      $region29: #{attr_network_forward.2} parent=27 // pred_check
        %p265 = pneg %p83
      $region30: #{attr_network_forward.2} parent=27 // pred_check_branch
        %267 = sbr.rel (%p265) target = $region32
      $region31: #{attr_network_forward.2} parent=27 // pred_region
        _
      $region32: #{attr_network_forward.2} parent=27 // pred_fallthru
        _
    $region28: #{attr_network_forward.2} parent=5 // pred_fallthru
      _
    %p268 = scmp.le.s32.totalorder 2, %s8
    // Predicated region
    $region33: #{attr_network_forward.2} parent=5 // pred_check
      %p269 = pneg %p268
    $region34: #{attr_network_forward.2} parent=5 // pred_check_branch
      %271 = sbr.rel (%p269) target = $region36
    $region35: #{attr_network_forward.2} parent=5 // pred_region
      %s272 = ssub.s32 %s8, 2
      // Predicated region
      $region37: #{attr_network_forward.2} parent=35 // pred_check
        %p273 = pneg %p89
      $region38: #{attr_network_forward.2} parent=35 // pred_check_branch
        %275 = sbr.rel (%p273) target = $region40
      $region39: #{attr_network_forward.2} parent=35 // pred_region
        %p276 = scmp.lt.s32.totalorder %s14, 1
        %s277 = scalar_select %p276, %s14, 1
        %s278 = smul.addr %s277, 8
        %s279 = scalar_lea.vmem %s2, %s278
      $region40: #{attr_network_forward.2} parent=35 // pred_fallthru
        _
    $region36: #{attr_network_forward.2} parent=5 // pred_fallthru
      _
  $region6: #{attr_network_forward.2} parent=0 // loop_footer
    %s12 = sadd.s32 1, %s8
  $region7: #{attr_network_forward.2} parent=0 // loop_footer_branch
    %7 = sbr.rel target = $region3
  $region8: #{attr_network_forward.2} parent=0 // loop_exit
    _

// kernel: attr_network_forward.3
$region0: #{attr_network_forward.3}
  #allocation0 [shape = 'u32[]', space=smem, size = 0x4, offset = 0x4, fixed_abs, tag = 'smem constant byte address 0x4 - core index']
  #allocation1 [shape = 'u32[144,128]{1,0:T(1,128)}', space=vmem, size = 0x12000, scoped, tag = 'internal scratch']
  %s0 = inlined_call_operand.vmem [shape: f32[8,10,128], index: 0, kind: input, shape index: {}]
  %s1 = inlined_call_operand.vmem [shape: f32[8,128], index: 1, kind: input, shape index: {}]
  %s2 = inlined_call_operand.vmem [shape: f32[8,10], index: 2, kind: output, shape index: {}]
  %s3 = sld [smem:[#allocation0]]
  $region18: #{attr_network_forward.3} parent=0
    _
  %s5 = ssub.s32 1, %s3
  %s6 = scalar_select 0, %s5, %s3
  // Predicated region
  $region2: #{attr_network_forward.3} parent=0 // pred_check
    _
  $region3: #{attr_network_forward.3} parent=0 // pred_check_branch
    %8 = sbr.rel (0) target = $region5
  $region4: #{attr_network_forward.3} parent=0 // pred_region
    _
  $region5: #{attr_network_forward.3} parent=0 // pred_fallthru
    _
  // Predicated region
  $region6: #{attr_network_forward.3} parent=0 // pred_check
    _
  $region7: #{attr_network_forward.3} parent=0 // pred_check_branch
    %10 = sbr.rel (0) target = $region9
  $region8: #{attr_network_forward.3} parent=0 // pred_region
    _
  $region9: #{attr_network_forward.3} parent=0 // pred_fallthru
    _
  %v11 = vld [vmem:[%s0] sm:$0xff]
  %v12 = vld [vmem:[%s0 + $0x8] sm:$0x3]
  %v13 = vld [vmem:[%s0 + $0x10] sm:$0xff]
  %v14 = vld [vmem:[%s0 + $0x18] sm:$0x3]
  %v15 = vld [vmem:[%s0 + $0x20] sm:$0xff]
  %v16 = vld [vmem:[%s0 + $0x28] sm:$0x3]
  %v17 = vld [vmem:[%s0 + $0x30] sm:$0xff]
  %v18 = vld [vmem:[%s0 + $0x38] sm:$0x3]
  %v19 = vld [vmem:[%s0 + $0x40] sm:$0xff]
  %v20 = vld [vmem:[%s0 + $0x48] sm:$0x3]
  %v21 = vld [vmem:[%s0 + $0x50] sm:$0xff]
  %v22 = vld [vmem:[%s0 + $0x58] sm:$0x3]
  %v23 = vld [vmem:[%s0 + $0x60] sm:$0xff]
  %v24 = vld [vmem:[%s0 + $0x68] sm:$0x3]
  %v25 = vld [vmem:[%s0 + $0x70] sm:$0xff]
  %v26 = vld [vmem:[%s0 + $0x78] sm:$0x3]
  %v27 = vld [vmem:[%s1] sm:$0xff]
  %v29 = vcombine.high %v27, %v27
  %v31 = vunpack.c.l.s4 1966171168
  %v32 = vunpack.c.0.s8 %v31
  %v33 = vlaneseq
  %v34 = vshrl.u32 %v33, 7
  %v35 = vsub.s32 %v32, %v34
  %v36 = vrot.slane %v27, %v35
  %v38 = vunpack.c.l.s4 1966171168
  %v39 = vunpack.c.0.s8 %v38
  %v40 = vlaneseq
  %v41 = vshrl.u32 %v40, 7
  %v42 = vsub.s32 %v39, %v41
  %v43 = vrot.slane %v29, %v42
  %v44 = vcombine.high %v36, %v36
  %v45 = vcombine.high %v43, %v43
  %v47 = vunpack.c.l.s4 1966171168
  %v48 = vunpack.c.0.s8 %v47
  %v49 = vlaneseq
  %v50 = vshrl.u32 %v49, 7
  %v51 = vsub.s32 %v48, %v50
  %v52 = vrot.slane %v36, %v51
  %v54 = vunpack.c.l.s4 1966171168
  %v55 = vunpack.c.0.s8 %v54
  %v56 = vlaneseq
  %v57 = vshrl.u32 %v56, 7
  %v58 = vsub.s32 %v55, %v57
  %v59 = vrot.slane %v43, %v58
  %v61 = vunpack.c.l.s4 1966171168
  %v62 = vunpack.c.0.s8 %v61
  %v63 = vlaneseq
  %v64 = vshrl.u32 %v63, 7
  %v65 = vsub.s32 %v62, %v64
  %v66 = vrot.slane %v44, %v65
  %v68 = vunpack.c.l.s4 1966171168
  %v69 = vunpack.c.0.s8 %v68
  %v70 = vlaneseq
  %v71 = vshrl.u32 %v70, 7
  %v72 = vsub.s32 %v69, %v71
  %v73 = vrot.slane %v45, %v72
  %v74 = vcombine.high %v52, %v52
  %v75 = vcombine.high %v59, %v59
  %v76 = vcombine.high %v66, %v66
  %v77 = vcombine.high %v73, %v73
  %v78 = vlaneseq
  %v79 = vshrl.u32 %v78, 7
  %v80 = vsub.s32 0, %v79
  %v81 = vrot.slane %v52, %v80
  %v82 = vlaneseq
  %v83 = vshrl.u32 %v82, 7
  %v84 = vsub.s32 0, %v83
  %v85 = vrot.slane %v66, %v84
  %v86 = vlaneseq
  %v87 = vshrl.u32 %v86, 7
  %v88 = vsub.s32 0, %v87
  %v89 = vrot.slane %v74, %v88
  %v90 = vlaneseq
  %v91 = vshrl.u32 %v90, 7
  %v92 = vsub.s32 0, %v91
  %v93 = vrot.slane %v76, %v92
  %v94 = vlaneseq
  %v95 = vshrl.u32 %v94, 7
  %v96 = vsub.s32 0, %v95
  %v97 = vrot.slane %v59, %v96
  %v98 = vlaneseq
  %v99 = vshrl.u32 %v98, 7
  %v100 = vsub.s32 0, %v99
  %v101 = vrot.slane %v73, %v100
  %v102 = vlaneseq
  %v103 = vshrl.u32 %v102, 7
  %v104 = vsub.s32 0, %v103
  %v105 = vrot.slane %v75, %v104
  %v106 = vlaneseq
  %v107 = vshrl.u32 %v106, 7
  %v108 = vsub.s32 0, %v107
  %v109 = vrot.slane %v77, %v108
  %v118 = vmul.f32 %v11, %v81
  %v119 = vmul.f32 %v12, %v81
  %v120 = vmul.f32 %v13, %v85
  %v121 = vmul.f32 %v14, %v85
  %v122 = vmul.f32 %v15, %v89
  %v123 = vmul.f32 %v16, %v89
  %v124 = vmul.f32 %v17, %v93
  %v125 = vmul.f32 %v18, %v93
  %v126 = vmul.f32 %v19, %v97
  %v127 = vmul.f32 %v20, %v97
  %v128 = vmul.f32 %v21, %v101
  %v129 = vmul.f32 %v22, %v101
  %v130 = vmul.f32 %v23, %v105
  %v131 = vmul.f32 %v24, %v105
  %v132 = vmul.f32 %v25, %v109
  %v133 = vmul.f32 %v26, %v109
  %134 = vadd.xlane.f32.xlu0 %v118
  %v135 = vpop.xlane.xlu0 %134
  %vm136 = vcmask 1041408
  %v137 = vsel %vm136, %v119, 0.0
  %138 = vadd.xlane.f32.xlu0 %v137
  %v139 = vpop.xlane.xlu0 %138
  %140 = vadd.xlane.f32.xlu0 %v120
  %v141 = vpop.xlane.xlu0 %140
  %v142 = vsel %vm136, %v121, 0.0
  %143 = vadd.xlane.f32.xlu0 %v142
  %v144 = vpop.xlane.xlu0 %143
  %145 = vadd.xlane.f32.xlu0 %v122
  %v146 = vpop.xlane.xlu0 %145
  %v147 = vsel %vm136, %v123, 0.0
  %148 = vadd.xlane.f32.xlu0 %v147
  %v149 = vpop.xlane.xlu0 %148
  %150 = vadd.xlane.f32.xlu0 %v124
  %v151 = vpop.xlane.xlu0 %150
  %v152 = vsel %vm136, %v125, 0.0
  %153 = vadd.xlane.f32.xlu0 %v152
  %v154 = vpop.xlane.xlu0 %153
  %155 = vadd.xlane.f32.xlu0 %v126
  %v156 = vpop.xlane.xlu0 %155
  %v157 = vsel %vm136, %v127, 0.0
  %158 = vadd.xlane.f32.xlu0 %v157
  %v159 = vpop.xlane.xlu0 %158
  %160 = vadd.xlane.f32.xlu0 %v128
  %v161 = vpop.xlane.xlu0 %160
  %v162 = vsel %vm136, %v129, 0.0
  %163 = vadd.xlane.f32.xlu0 %v162
  %v164 = vpop.xlane.xlu0 %163
  %165 = vadd.xlane.f32.xlu0 %v130
  %v166 = vpop.xlane.xlu0 %165
  %v167 = vsel %vm136, %v131, 0.0
  %168 = vadd.xlane.f32.xlu0 %v167
  %v169 = vpop.xlane.xlu0 %168
  %170 = vadd.xlane.f32.xlu0 %v132
  %v171 = vpop.xlane.xlu0 %170
  %v172 = vsel %vm136, %v133, 0.0
  %173 = vadd.xlane.f32.xlu0 %v172
  %v174 = vpop.xlane.xlu0 %173
  %v191 = vlaneseq
  %v192 = vand.u32 %v191, 127
  %v193 = vlaneseq
  %v194 = vshrl.u32 %v193, 7
  %v195 = vsub.s32 %v192, %v194
  %v196 = vrot.slane %v135, %v195
  %v197 = vadd.s32 %v192, 4294967288
  %v198 = vlaneseq
  %v199 = vshrl.u32 %v198, 7
  %v200 = vsub.s32 %v197, %v199
  %v201 = vrot.slane %v139, %v200
  %vm202 = vcmask 130112
  %v203 = vsel %vm202, %v201, %v196
  %v204 = vlaneseq
  %v205 = vshrl.u32 %v204, 7
  %v206 = vsub.s32 %v192, %v205
  %v207 = vrot.slane %v141, %v206
  %v208 = vlaneseq
  %v209 = vshrl.u32 %v208, 7
  %v210 = vsub.s32 %v197, %v209
  %v211 = vrot.slane %v144, %v210
  %v212 = vsel %vm202, %v211, %v207
  %v213 = vlaneseq
  %v214 = vshrl.u32 %v213, 7
  %v215 = vsub.s32 %v192, %v214
  %v216 = vrot.slane %v146, %v215
  %v217 = vlaneseq
  %v218 = vshrl.u32 %v217, 7
  %v219 = vsub.s32 %v197, %v218
  %v220 = vrot.slane %v149, %v219
  %v221 = vsel %vm202, %v220, %v216
  %v222 = vlaneseq
  %v223 = vshrl.u32 %v222, 7
  %v224 = vsub.s32 %v192, %v223
  %v225 = vrot.slane %v151, %v224
  %v226 = vlaneseq
  %v227 = vshrl.u32 %v226, 7
  %v228 = vsub.s32 %v197, %v227
  %v229 = vrot.slane %v154, %v228
  %v230 = vsel %vm202, %v229, %v225
  %v231 = vlaneseq
  %v232 = vshrl.u32 %v231, 7
  %v233 = vsub.s32 %v192, %v232
  %v234 = vrot.slane %v156, %v233
  %v235 = vlaneseq
  %v236 = vshrl.u32 %v235, 7
  %v237 = vsub.s32 %v197, %v236
  %v238 = vrot.slane %v159, %v237
  %v239 = vsel %vm202, %v238, %v234
  %v240 = vlaneseq
  %v241 = vshrl.u32 %v240, 7
  %v242 = vsub.s32 %v192, %v241
  %v243 = vrot.slane %v161, %v242
  %v244 = vlaneseq
  %v245 = vshrl.u32 %v244, 7
  %v246 = vsub.s32 %v197, %v245
  %v247 = vrot.slane %v164, %v246
  %v248 = vsel %vm202, %v247, %v243
  %v249 = vlaneseq
  %v250 = vshrl.u32 %v249, 7
  %v251 = vsub.s32 %v192, %v250
  %v252 = vrot.slane %v166, %v251
  %v253 = vlaneseq
  %v254 = vshrl.u32 %v253, 7
  %v255 = vsub.s32 %v197, %v254
  %v256 = vrot.slane %v169, %v255
  %v257 = vsel %vm202, %v256, %v252
  %v258 = vlaneseq
  %v259 = vshrl.u32 %v258, 7
  %v260 = vsub.s32 %v192, %v259
  %v261 = vrot.slane %v171, %v260
  %v262 = vlaneseq
  %v263 = vshrl.u32 %v262, 7
  %v264 = vsub.s32 %v197, %v263
  %v265 = vrot.slane %v174, %v264
  %v266 = vsel %vm202, %v265, %v261
  %vm267 = vcmask 1041409
  %v268 = vsel %vm267, %v212, %v203
  %vm269 = vcmask 1042434
  %v270 = vsel %vm269, %v221, %v268
  %vm271 = vcmask 1043459
  %v272 = vsel %vm271, %v230, %v270
  %vm273 = vcmask 1044484
  %v274 = vsel %vm273, %v239, %v272
  %vm275 = vcmask 1045509
  %v276 = vsel %vm275, %v248, %v274
  %vm277 = vcmask 1046534
  %v278 = vsel %vm277, %v257, %v276
  %vm279 = vcmask 1047559
  %v280 = vsel %vm279, %v266, %v278
  %vm282 = vcmask 80896
  %283 = vst.msk [vmem:[%s2] sm:$0xff] %vm282, %v280
  // Predicated region
  $region10: #{attr_network_forward.3} parent=0 // pred_check
    _
  $region11: #{attr_network_forward.3} parent=0 // pred_check_branch
    %285 = sbr.rel (0) target = $region13
  $region12: #{attr_network_forward.3} parent=0 // pred_region
    _
  $region13: #{attr_network_forward.3} parent=0 // pred_fallthru
    _
  // Predicated region
  $region14: #{attr_network_forward.3} parent=0 // pred_check
    _
  $region15: #{attr_network_forward.3} parent=0 // pred_check_branch
    %287 = sbr.rel (0) target = $region17
  $region16: #{attr_network_forward.3} parent=0 // pred_region
    _
  $region17: #{attr_network_forward.3} parent=0 // pred_fallthru
    _

</llo_original>
